<compile_context>
chip_gen: v7x
topology: tpu7x:2x2x1
jax: 0.10.0
libtpu: 0.0.40
codegen_flags: <defaults>
</compile_context>

<pallas_src>
import functools

import jax
import jax.numpy as jnp
from jax import lax
from jax.experimental import pallas as pl
from jax.experimental.pallas import tpu as pltpu


def _round_up(x, m):
    return (x + m - 1) // m * m


def _itemsize(dt):
    return jnp.zeros((), dt).dtype.itemsize


def _device_vmem_bytes():
    try:
        return int(pltpu.get_tpu_info().vmem_capacity_bytes)
    except Exception:
        return 64 << 20  # v7x-safe fallback


def _is_v5e():
    try:
        kind = jax.devices()[0].device_kind.lower()
        return ("v5e" in kind) or ("v5 lite" in kind) or ("v5lite" in kind)
    except Exception:
        return False


# --------------------------- Pallas kernel -----------------------------------

def _conv_bn_act_kernel(x_ref, *rest, K, lt, apply_relu):
    """One (batch, L-tile, C_out-tile) output block of Conv1d + folded BN/bias + ReLU.

    x_ref : (1, lt, C_in)        current L-tile of the padded, channel-last input
    xh_ref: (1, halo, C_in)      first K-1 (rounded to 16) rows of the next tile  [K>1 only]
    w_ref : (K, C_in, CO_TILE)   conv taps with BN scale folded in
    b_ref : (1, CO_TILE)         folded shift/bias (f32)
    o_ref : (1, lt, CO_TILE)
    """
    if K > 1:
        xh_ref, w_ref, b_ref, o_ref = rest
        # Single sublane-aligned append of the narrow halo (NOT a K-fold im2col slab).
        win = jnp.concatenate([x_ref[0], xh_ref[0]], axis=0)     # (lt + halo, C_in)
    else:
        w_ref, b_ref, o_ref = rest
        win = x_ref[0]                                           # (lt, C_in)

    # K accumulating per-tap MXU matmuls with f32 accumulation.
    acc = jnp.dot(win[:lt, :], w_ref[0], preferred_element_type=jnp.float32)
    for k in range(1, K):
        acc = acc + jnp.dot(win[k:k + lt, :], w_ref[k],
                            preferred_element_type=jnp.float32)

    y = acc + b_ref[...]
    if apply_relu:
        y = jnp.maximum(y, 0.0)
    o_ref[0] = y.astype(o_ref.dtype)


# --------------------------- Parameter preparation ---------------------------

def prepare_convblock1d(w_oik, *, bias=None, bn=None, bn_eps=1e-5, activation="relu",
                        stride=1, padding=0, dilation=1, groups=1,
                        compute_dtype=jnp.float32, im2col=None):
    """Fold BN (and conv bias) into the conv weights once, off the forward path.

    w_oik: PyTorch Conv1d weight, shape (out_channels, in_channels, kernel_size).
    bn:    None or (gamma, beta, running_mean, running_var).
    """
    if groups != 1:
        # TODO(synk): grouped / depthwise Conv1d (groups != 1) is not implemented.
        raise NotImplementedError("groups != 1 is not implemented")
    c_out, c_in, k = w_oik.shape

    if bn is not None:
        gamma, beta, mean, var = bn
        scale = (gamma / jnp.sqrt(var + bn_eps)).astype(jnp.float32)
        shift = (beta - mean * scale).astype(jnp.float32)
    else:
        scale = jnp.ones((c_out,), jnp.float32)
        shift = jnp.zeros((c_out,), jnp.float32)
    if bias is not None:
        shift = shift + scale * bias   # BN(conv(x)+b) = scale*conv(x) + (scale*b + shift)

    # Path selection: tiny C_in (or strided/dilated conv) -> wrapper-side im2col and a
    # plain in-kernel GEMM; otherwise K per-tap matmuls in-kernel.
    if im2col is None:
        im2col = (c_in < 128) or (stride != 1) or (dilation != 1)
    if (stride != 1 or dilation != 1) and not im2col:
        raise NotImplementedError("stride>1 / dilation>1 only supported on the im2col path")

    co_pad = _round_up(c_out, 128)                   # lane-dense output channels
    w_kio = jnp.transpose(w_oik, (2, 1, 0)).astype(jnp.float32) * scale[None, None, :]

    if im2col:
        # Flatten taps into the contraction dim and pad it to a clean MXU depth.
        cmult = 128 if _is_v5e() else 256            # v5e MXU 128-deep; v6e/v7x 256-deep
        kci_pad = _round_up(k * c_in, cmult)
        w_mat = w_kio.reshape(k * c_in, c_out)
        w_mat = jnp.pad(w_mat, ((0, kci_pad - k * c_in), (0, co_pad - c_out)))
        w_ker = w_mat[None].astype(compute_dtype)    # (1, kci_pad, co_pad)
        k_eff, ci_eff = 1, kci_pad
    else:
        w_ker = jnp.pad(w_kio, ((0, 0), (0, 0),
                                (0, co_pad - c_out))).astype(compute_dtype)
        k_eff, ci_eff = k, c_in                      # (K, C_in, co_pad)

    shift_p = jnp.pad(shift, (0, co_pad - c_out)).astype(jnp.float32)[None, :]

    return dict(w=w_ker, shift=shift_p, K=k, K_eff=k_eff, C_in=c_in, C_in_eff=ci_eff,
                C_out=c_out, C_out_pad=co_pad, stride=stride, padding=padding,
                dilation=dilation, im2col=im2col, relu=activation is not None,
                compute_dtype=compute_dtype)


# --------------------------- Tile selection -----------------------------------

def _select_tiles(*, l_out, k_eff, ci_eff, co_pad, halo, in_sz, w_sz, out_sz):
    """Pick (L tile, C_out tile, vmem_limit) from the device's VMEM capacity."""
    cap = _device_vmem_bytes()
    budget = cap // 2                                 # double-buffered block budget
    vmem_limit = int(cap * 0.85)

    halo_mult = halo if k_eff > 1 else 16             # lt must be a multiple of halo
    lt_cap = _round_up(l_out, halo_mult)

    def need(lt, co_t):
        n = 2 * lt * ci_eff * in_sz                                   # input (x2 buf)
        if k_eff > 1:
            n += 2 * halo * ci_eff * in_sz                            # halo rows (x2)
            n += (lt + halo) * ci_eff * in_sz                         # assembled window
        n += 2 * k_eff * ci_eff * co_t * w_sz                         # weights (x2)
        n += 2 * lt * co_t * out_sz + lt * co_t * 4                   # output + f32 acc
        return n + (2 << 20)                                          # misc headroom

    co_opts = [128] if (_is_v5e() or co_pad % 256 != 0) else [256, 128]

    def best_lt(co_t):
        lt = min(_round_up(512, halo_mult), lt_cap)
        while lt > halo_mult and need(lt, co_t) > budget:
            lt = max(halo_mult, (lt // 2) // halo_mult * halo_mult)
        return lt

    co_t = co_opts[0]
    lt = best_lt(co_t)
    if len(co_opts) > 1 and (lt < 128 or need(lt, co_t) > budget):
        lt2 = best_lt(co_opts[1])
        if lt2 > lt:
            co_t, lt = co_opts[1], lt2
    return lt, co_t, vmem_limit


# --------------------------- Forward (wrapper) --------------------------------

def conv_block1d_forward(x, params, *, input_format="NCL", output_format=None,
                         out_dtype=jnp.float32):
    """ConvBlock1d forward (inference).

    x: (N, C_in, L) for input_format="NCL" (PyTorch layout) or (N, L, C_in) for "NLC".
    Returns (N, C_out, L_out) or (N, L_out, C_out) in `out_dtype`.
    """
    assert input_format in ("NCL", "NLC")
    if output_format is None:
        output_format = input_format
    assert output_format in ("NCL", "NLC")

    cdt = params["compute_dtype"]
    k, stride = params["K"], params["stride"]
    padding, dilation = params["padding"], params["dilation"]

    x_nlc = jnp.transpose(x, (0, 2, 1)) if input_format == "NCL" else x
    n, seq_len, c_in = x_nlc.shape
    assert c_in == params["C_in"]
    l_out = (seq_len + 2 * padding - dilation * (k - 1) - 1) // stride + 1
    assert l_out > 0
    x_nlc = x_nlc.astype(cdt)

    k_eff, ci_eff = params["K_eff"], params["C_in_eff"]
    co_pad = params["C_out_pad"]
    halo = _round_up(max(k_eff - 1, 1), 16)
    in_sz = _itemsize(cdt)
    out_sz = _itemsize(out_dtype)

    lt, co_tile, vmem_limit = _select_tiles(
        l_out=l_out, k_eff=k_eff, ci_eff=ci_eff, co_pad=co_pad, halo=halo,
        in_sz=in_sz, w_sz=in_sz, out_sz=out_sz)
    n_l = pl.cdiv(l_out, lt)
    n_co = co_pad // co_tile

    if params["im2col"]:
        # Gather K taps once in the wrapper (cheap for tiny C_in); kernel is a plain GEMM.
        xpad = jnp.pad(x_nlc, ((0, 0), (padding, padding), (0, 0)))
        taps = [lax.slice_in_dim(xpad, kk * dilation,
                                 kk * dilation + (l_out - 1) * stride + 1,
                                 stride=stride, axis=1) for kk in range(k)]
        xp = jnp.concatenate(taps, axis=-1)                      # (N, l_out, K*C_in)
        xp = jnp.pad(xp, ((0, 0), (0, n_l * lt - l_out), (0, ci_eff - k * c_in)))
    else:
        lp = n_l * lt + halo
        xp = jnp.pad(x_nlc, ((0, 0), (padding, lp - padding - seq_len), (0, 0)))
        # Halo block indexing requires these; guard against future lt-rounding changes.
        assert lt % halo == 0 and xp.shape[1] == n_l * lt + halo

    # Grid order from actual byte counts: weights-outermost fetches each weight tile
    # once; C_out-innermost fetches activations once.  Pick whichever moves fewer bytes.
    act_bytes = n * xp.shape[1] * ci_eff * in_sz
    w_bytes = k_eff * ci_eff * co_pad * in_sz
    weights_outer = (w_bytes + act_bytes * n_co) <= (w_bytes * n * n_l + act_bytes)

    hb = lt // halo                                   # halo blocks per L tile
    if weights_outer:
        grid = (n_co, n, n_l)
        x_map = lambda co, b, l: (b, l, 0)
        h_map = lambda co, b, l: (b, (l + 1) * hb, 0)
        w_map = lambda co, b, l: (0, 0, co)
        s_map = lambda co, b, l: (0, co)
        o_map = lambda co, b, l: (b, l, co)
    else:
        grid = (n, n_l, n_co)
        x_map = lambda b, l, co: (b, l, 0)
        h_map = lambda b, l, co: (b, (l + 1) * hb, 0)
        w_map = lambda b, l, co: (0, 0, co)
        s_map = lambda b, l, co: (0, co)
        o_map = lambda b, l, co: (b, l, co)

    in_specs = [pl.BlockSpec((1, lt, ci_eff), x_map)]
    operands = [xp]
    if k_eff > 1:
        in_specs.append(pl.BlockSpec((1, halo, ci_eff), h_map))   # narrow halo view
        operands.append(xp)
    in_specs += [pl.BlockSpec((k_eff, ci_eff, co_tile), w_map),
                 pl.BlockSpec((1, co_tile), s_map)]
    operands += [params["w"], params["shift"]]

    kernel = functools.partial(_conv_bn_act_kernel, K=k_eff, lt=lt,
                               apply_relu=params["relu"])
    out = pl.pallas_call(
        kernel,
        out_shape=jax.ShapeDtypeStruct((n, n_l * lt, co_pad), out_dtype),
        grid_spec=pltpu.PrefetchScalarGridSpec(
            num_scalar_prefetch=0, grid=grid,
            in_specs=in_specs,
            out_specs=pl.BlockSpec((1, lt, co_tile), o_map)),
        compiler_params=pltpu.CompilerParams(
            dimension_semantics=("parallel", "parallel", "parallel"),
            vmem_limit_bytes=vmem_limit),
    )(*operands)

    # Strip L/C padding (no-ops when l_out / C_out are already tile-aligned).
    out = out[:, :l_out, :params["C_out"]]
    # TODO(synk): Dropout is identity at inference and is not implemented (train mode).
    if output_format == "NCL":
        out = jnp.transpose(out, (0, 2, 1))
    return out


# --------------------------- Pure-JAX reference -------------------------------

def conv_block1d_ref(x_ncl, w_oik, *, bias=None, bn=None, bn_eps=1e-5,
                     activation="relu", stride=1, padding=0, dilation=1):
    y = lax.conv_general_dilated(x_ncl, w_oik, window_strides=(stride,),
                                 padding=[(padding, padding)],
                                 rhs_dilation=(dilation,),
                                 dimension_numbers=("NCH", "OIH", "NCH"))
    if bias is not None:
        y = y + bias[None, :, None]
    if bn is not None:
        gamma, beta, mean, var = bn
        y = (y - mean[None, :, None]) / jnp.sqrt(var[None, :, None] + bn_eps)
        y = y * gamma[None, :, None] + beta[None, :, None]
    if activation is not None:
        y = jnp.maximum(y, 0.0)
    return y


# --------------------------- Main ---------------------------------------------

if __name__ == "__main__":
    key = jax.random.PRNGKey(0)
    kx, kw, kg, kb, km, kv, kbias = jax.random.split(key, 7)

    N, C_IN, C_OUT, L = 2, 16, 32, 64
    K, PADDING, BN_EPS = 11, 5, 1e-5
    DROPOUT = 0.2  # identity at inference

    x = jax.random.normal(kx, (N, C_IN, L), jnp.float32)
    w = jax.random.normal(kw, (C_OUT, C_IN, K), jnp.float32) * 0.05
    gamma = 1.0 + 0.1 * jax.random.normal(kg, (C_OUT,), jnp.float32)
    beta = 0.1 * jax.random.normal(kb, (C_OUT,), jnp.float32)
    mean = 0.05 * jax.random.normal(km, (C_OUT,), jnp.float32)
    var = 0.5 + jnp.abs(jax.random.normal(kv, (C_OUT,), jnp.float32))
    bn = (gamma, beta, mean, var)

    def check(out, ref, tol, name):
        assert out.shape == ref.shape, (name, out.shape, ref.shape)
        err = float(jnp.max(jnp.abs(out.astype(jnp.float32) - ref)))
        assert err <= tol, (name, err)

    ref = conv_block1d_ref(x, w, bn=bn, bn_eps=BN_EPS, activation="relu",
                           stride=1, padding=PADDING)
    assert ref.shape == (N, C_OUT, L)

    # 1) Conv + BN + ReLU, f32, auto path (wrapper im2col GEMM for tiny C_in).
    pA = prepare_convblock1d(w, bn=bn, bn_eps=BN_EPS, activation="relu",
                             stride=1, padding=PADDING)
    outA = jax.block_until_ready(conv_block1d_forward(x, pA))
    check(outA, ref, 1e-3, "im2col/f32")

    # 2) Same block, per-tap (narrow-halo) kernel path forced.
    pB = prepare_convblock1d(w, bn=bn, bn_eps=BN_EPS, activation="relu",
                             stride=1, padding=PADDING, im2col=False)
    outB = jax.block_until_ready(conv_block1d_forward(x, pB))
    check(outB, ref, 1e-3, "per-tap/f32")

    # 3) bf16 activations/weights with f32 MXU accumulation.
    pC = prepare_convblock1d(w, bn=bn, bn_eps=BN_EPS, activation="relu",
                             stride=1, padding=PADDING, compute_dtype=jnp.bfloat16)
    outC = jax.block_until_ready(conv_block1d_forward(x, pC))
    check(outC, ref, 7e-2, "im2col/bf16")

    # 4) No BN, conv bias, no activation — other module flags, per-tap path.
    bias = 0.1 * jax.random.normal(kbias, (C_OUT,), jnp.float32)
    pD = prepare_convblock1d(w, bias=bias, bn=None, activation=None,
                             stride=1, padding=PADDING, im2col=False)
    outD = jax.block_until_ready(conv_block1d_forward(x, pD))
    refD = conv_block1d_ref(x, w, bias=bias, bn=None, activation=None,
                            stride=1, padding=PADDING)
    check(outD, refD, 1e-3, "per-tap/bias")

    # 5) Channel-last in/out (no transposes between chained blocks) + bf16 output.
    x_nlc = jnp.transpose(x, (0, 2, 1))
    outE = jax.block_until_ready(conv_block1d_forward(
        x_nlc, pA, input_format="NLC", out_dtype=jnp.bfloat16))
    check(jnp.transpose(outE, (0, 2, 1)), ref, 7e-2, "NLC/bf16-out")

    # 6) Strided conv (Jasper prologue style), stride=2 via the im2col path.
    pF = prepare_convblock1d(w, bn=bn, bn_eps=BN_EPS, activation="relu",
                             stride=2, padding=PADDING)
    outF = jax.block_until_ready(conv_block1d_forward(x, pF))
    refF = conv_block1d_ref(x, w, bn=bn, bn_eps=BN_EPS, activation="relu",
                            stride=2, padding=PADDING)
    check(outF, refF, 1e-3, "stride2")

    print("KERNEL_OK")
</pallas_src>

<mosaic_0001>
module attributes {stable_mosaic.version = 11 : i64} {
  func.func @_conv_bn_act_kernel(%arg0: i32, %arg1: i32, %arg2: i32, %arg3: memref<1x64x256xf32, #tpu.memory_space<vmem>>, %arg4: memref<1x256x128xf32, #tpu.memory_space<vmem>>, %arg5: memref<1x128xf32, #tpu.memory_space<vmem>>, %arg6: memref<1x64x128xf32, #tpu.memory_space<vmem>>) attributes {dimension_semantics = [#tpu.dimension_semantics<parallel>, #tpu.dimension_semantics<parallel>, #tpu.dimension_semantics<parallel>], iteration_bounds = array<i64: 1, 2, 1>, scalar_prefetch = 0 : i64, scratch_operands = 0 : i64, tpu.core_type = #tpu.core_type<tc>, window_params = [{transform_indices = @transform_0, window_bounds = array<i64: 1, 64, 256>}, {transform_indices = @transform_1, window_bounds = array<i64: 1, 256, 128>}, {transform_indices = @transform_2, window_bounds = array<i64: 1, 128>}, {transform_indices = @transform_3, window_bounds = array<i64: 1, 64, 128>}]} {
    %c0 = arith.constant 0 : index
    %c0_0 = arith.constant 0 : index
    %c0_1 = arith.constant 0 : index
    %0 = vector.load %arg3[%c0, %c0_0, %c0_1] : memref<1x64x256xf32, #tpu.memory_space<vmem>>, vector<1x64x256xf32>
    %1 = vector.shape_cast %0 : vector<1x64x256xf32> to vector<64x256xf32>
    %c0_2 = arith.constant 0 : index
    %c0_3 = arith.constant 0 : index
    %c0_4 = arith.constant 0 : index
    %2 = vector.load %arg4[%c0_2, %c0_3, %c0_4] : memref<1x256x128xf32, #tpu.memory_space<vmem>>, vector<1x256x128xf32>
    %3 = vector.shape_cast %2 : vector<1x256x128xf32> to vector<256x128xf32>
    %cst = arith.constant dense<0.000000e+00> : vector<64x128xf32>
    %4 = tpu.matmul %1, %3, %cst {dimension_numbers = #tpu.dot_dimension_numbers<[1], [0], [0], [1], [0, 0, 1, 1], [], []>} : vector<64x256xf32>, vector<256x128xf32>, vector<64x128xf32> -> vector<64x128xf32>
    %c0_5 = arith.constant 0 : index
    %c0_6 = arith.constant 0 : index
    %5 = vector.load %arg5[%c0_5, %c0_6] : memref<1x128xf32, #tpu.memory_space<vmem>>, vector<1x128xf32>
    %6 = vector.broadcast %5 : vector<1x128xf32> to vector<64x128xf32>
    %7 = arith.addf %4, %6 : vector<64x128xf32>
    %cst_7 = arith.constant 0.000000e+00 : f32
    %8 = vector.broadcast %cst_7 : f32 to vector<64x128xf32>
    %9 = arith.maximumf %7, %8 : vector<64x128xf32>
    %c0_8 = arith.constant 0 : index
    %c0_9 = arith.constant 0 : index
    %c0_10 = arith.constant 0 : index
    %10 = vector.load %arg6[%c0_8, %c0_9, %c0_10] : memref<1x64x128xf32, #tpu.memory_space<vmem>>, vector<1x64x128xf32>
    %11 = vector.shape_cast %10 : vector<1x64x128xf32> to vector<64x128xf32>
    %12 = vector.shape_cast %9 : vector<64x128xf32> to vector<1x64x128xf32>
    tpu.vector_store %arg6[%c0_8, %c0_9, %c0_10], %12 {strides = array<i32>} : memref<1x64x128xf32, #tpu.memory_space<vmem>>, vector<1x64x128xf32>,
    return
  }
  func.func @transform_0(%arg0: i32, %arg1: i32, %arg2: i32) -> (i32, i32, i32) {
    %c0_i32 = arith.constant 0 : i32
    %c0_i32_0 = arith.constant 0 : i32
    return %arg1, %arg2, %c0_i32 : i32, i32, i32
  }
  func.func @transform_1(%arg0: i32, %arg1: i32, %arg2: i32) -> (i32, i32, i32) {
    %c0_i32 = arith.constant 0 : i32
    %c0_i32_0 = arith.constant 0 : i32
    %c0_i32_1 = arith.constant 0 : i32
    return %c0_i32, %c0_i32_0, %arg0 : i32, i32, i32
  }
  func.func @transform_2(%arg0: i32, %arg1: i32, %arg2: i32) -> (i32, i32) {
    %c0_i32 = arith.constant 0 : i32
    %c0_i32_0 = arith.constant 0 : i32
    return %c0_i32, %arg0 : i32, i32
  }
  func.func @transform_3(%arg0: i32, %arg1: i32, %arg2: i32) -> (i32, i32, i32) {
    %c0_i32 = arith.constant 0 : i32
    return %arg1, %arg2, %arg0 : i32, i32, i32
  }
}

</mosaic_0001>

<llo_original>
// kernel: tpu_custom_call.1
$region0: #{tpu_custom_call.1}
  #allocation0 [shape = 'u32[]', space=smem, size = 0x4, offset = 0x4, fixed_abs, tag = 'smem constant byte address 0x4 - core index']
  #allocation1 [shape = 'u32[144,128]{1,0:T(1,128)}', space=vmem, size = 0x12000, scoped, tag = 'internal scratch']
  %s0 = inlined_call_operand.hbm [shape: f32[2,64,256], index: 0, kind: input, shape index: {}]
  %s1 = inlined_call_operand.hbm [shape: f32[1,256,128], index: 1, kind: input, shape index: {}]
  %s2 = inlined_call_operand.vmem [shape: f32[1,128], index: 2, kind: input, shape index: {}]
  %s3 = inlined_call_operand.hbm [shape: f32[2,64,128], index: 3, kind: output, shape index: {}]
  %s4 = sld [smem:[#allocation0]]
  $region53: #{tpu_custom_call.1} parent=0
    _
  %s6 = ssub.s32 1, %s4
  %s7 = scalar_select 0, %s6, %s4
  $region1: #{tpu_custom_call.1} parent=0
    #allocation2 [shape = 'u8[131072]{0}', space=vmem, size = 0x20000, scoped, tag = 'input window, operand 0']
    #allocation3 [shape = 's32[2]{0}', space=sflag, size = 0x8, scoped, tag = 'scoped memory for tpu_custom_call.1']
    #allocation4 [shape = 's32[2]{0}', space=sflag, size = 0x8, scoped, tag = 'scoped memory for tpu_custom_call.1']
    #allocation5 [shape = 'u8[131072]{0}', space=vmem, size = 0x20000, scoped, tag = 'input window, operand 1, single buffered']
    #allocation6 [shape = 's32[1]{0}', space=sflag, size = 0x4, scoped, tag = 'scoped memory for tpu_custom_call.1']
    #allocation7 [shape = 'u8[65536]{0}', space=vmem, size = 0x10000, scoped, tag = 'output window, operand 0']
    %8 = vsyncpa [#allocation3], 0
    %s9 = scalar_lea.sflag [#allocation3], 1
    %10 = vsyncpa %s9, 0
    %11 = vsyncpa [#allocation6], 0
    %12 = vsyncpa [#allocation4], 0
    %s13 = scalar_lea.sflag [#allocation4], 1
    %14 = vsyncpa %s13, 0
    loop: start=0, step=1, limit=4
    $region2: #{tpu_custom_call.1} parent=1 // loop_pre_header
      _
    $region3: #{tpu_custom_call.1} parent=1 // loop_header
      %s16 = sphi 0, %s20
      %p17 = scmp.ge.s32.totalorder %s16, 4
      %s23 = sphi 0, %s42
      %s24 = sphi 0, %s38
      %s25 = sphi 0, %s34
      %s26 = sphi 0, %s23
      %s27 = sphi 0, %s24
      %s28 = sphi 0, %s25
      %s29 = sphi 0, %s26
      %s30 = sphi 0, %s27
      %s31 = sphi 0, %s28
      %s47 = sphi 0, %s49
      %s50 = sphi 0, %s47
      %s51 = sphi 0, %s50
      %s67 = sphi 0, %s51
      %s73 = sphi 0, %s75
      %s76 = sphi 0, %s73
      %s77 = sphi 0, %s76
      %s93 = sphi 0, %s77
      %s99 = sphi 0, %s101
      %s102 = sphi 0, %s99
      %s103 = sphi 0, %s102
      %s119 = sphi 0, %s103
      %s129 = sphi 0, %s131
      %s132 = sphi 0, %s129
      %s133 = sphi 0, %s132
      %s149 = sphi 0, %s133
    $region4: #{tpu_custom_call.1} parent=1 // loop_header_branch
      %19 = sbr.rel (%p17) target = $region8
    $region5: #{tpu_custom_call.1} parent=1 // loop_body
      %s21 = ssub.s32 %s16, 1
      %s22 = ssub.s32 %s16, 2
      %s32 = sadd.s32 1, %s25
      %p33 = scmp.ge.s32.totalorder %s32, 1
      %s34 = scalar_select %p33, 0, %s32
      %s35 = sadd.s32 1, %s24
      %s36 = scalar_select %p33, %s35, %s24
      %p37 = scmp.ge.s32.totalorder %s36, 2
      %s38 = scalar_select %p37, 0, %s36
      %s39 = sadd.s32 1, %s23
      %s40 = scalar_select %p37, %s39, %s23
      %p41 = scmp.ge.s32.totalorder %s40, 1
      %s42 = scalar_select %p41, 0, %s40
      %s43 = ssub.s32 %s24, %s38
      %s44 = ssub.s32 %s25, %s34
      %s45 = sor.u32 %s43, %s44
      %p46 = scmp.eq.s32.totalorder %s45, 0
      %s48 = sadd.s32 %s47, 1
      %s49 = scalar_select %p46, %s47, %s48
      %p52 = pneg %p46
      %p53 = scmp.eq.s32.totalorder %s16, 1
      %p54 = por %p52, %p53
      %p55 = scmp.ne.s32.totalorder %s47, %s50
      %p56 = scmp.eq.s32.totalorder %s16, 0
      %p57 = por %p55, %p56
      %p58 = scmp.ne.s32.totalorder %s47, %s50
      %p59 = scmp.eq.s32.totalorder %s21, 1
      %p60 = por %p58, %p59
      %p61 = scmp.ne.s32.totalorder %s50, %s51
      %p62 = scmp.eq.s32.totalorder %s21, 0
      %p63 = por %p61, %p62
      %p64 = scmp.ne.s32.totalorder %s50, %s51
      %p65 = scmp.eq.s32.totalorder %s22, 1
      %p66 = por %p64, %p65
      %p68 = scmp.ne.s32.totalorder %s51, %s67
      %p69 = scmp.eq.s32.totalorder %s22, 0
      %p70 = por %p68, %p69
      %s71 = ssub.s32 %s23, %s42
      %p72 = scmp.eq.s32.totalorder %s71, 0
      %s74 = sadd.s32 %s73, 1
      %s75 = scalar_select %p72, %s73, %s74
      %p78 = pneg %p72
      %p79 = scmp.eq.s32.totalorder %s16, 1
      %p80 = por %p78, %p79
      %p81 = scmp.ne.s32.totalorder %s73, %s76
      %p82 = scmp.eq.s32.totalorder %s16, 0
      %p83 = por %p81, %p82
      %p84 = scmp.ne.s32.totalorder %s73, %s76
      %p85 = scmp.eq.s32.totalorder %s21, 1
      %p86 = por %p84, %p85
      %p87 = scmp.ne.s32.totalorder %s76, %s77
      %p88 = scmp.eq.s32.totalorder %s21, 0
      %p89 = por %p87, %p88
      %p90 = scmp.ne.s32.totalorder %s76, %s77
      %p91 = scmp.eq.s32.totalorder %s22, 1
      %p92 = por %p90, %p91
      %p94 = scmp.ne.s32.totalorder %s77, %s93
      %p95 = scmp.eq.s32.totalorder %s22, 0
      %p96 = por %p94, %p95
      %s97 = ssub.s32 %s23, %s42
      %p98 = scmp.eq.s32.totalorder %s97, 0
      %s100 = sadd.s32 %s99, 1
      %s101 = scalar_select %p98, %s99, %s100
      %p104 = pneg %p98
      %p105 = scmp.eq.s32.totalorder %s16, 1
      %p106 = por %p104, %p105
      %p107 = scmp.ne.s32.totalorder %s99, %s102
      %p108 = scmp.eq.s32.totalorder %s16, 0
      %p109 = por %p107, %p108
      %p110 = scmp.ne.s32.totalorder %s99, %s102
      %p111 = scmp.eq.s32.totalorder %s21, 1
      %p112 = por %p110, %p111
      %p113 = scmp.ne.s32.totalorder %s102, %s103
      %p114 = scmp.eq.s32.totalorder %s21, 0
      %p115 = por %p113, %p114
      %p116 = scmp.ne.s32.totalorder %s102, %s103
      %p117 = scmp.eq.s32.totalorder %s22, 1
      %p118 = por %p116, %p117
      %p120 = scmp.ne.s32.totalorder %s103, %s119
      %p121 = scmp.eq.s32.totalorder %s22, 0
      %p122 = por %p120, %p121
      %s123 = ssub.s32 %s24, %s38
      %s124 = ssub.s32 %s25, %s34
      %s125 = sor.u32 %s123, %s124
      %s126 = ssub.s32 %s23, %s42
      %s127 = sor.u32 %s125, %s126
      %p128 = scmp.eq.s32.totalorder %s127, 0
      %s130 = sadd.s32 %s129, 1
      %s131 = scalar_select %p128, %s129, %s130
      %p134 = pneg %p128
      %p135 = scmp.eq.s32.totalorder %s16, 1
      %p136 = por %p134, %p135
      %p137 = scmp.ne.s32.totalorder %s129, %s132
      %p138 = scmp.eq.s32.totalorder %s16, 0
      %p139 = por %p137, %p138
      %p140 = scmp.ne.s32.totalorder %s129, %s132
      %p141 = scmp.eq.s32.totalorder %s21, 1
      %p142 = por %p140, %p141
      %p143 = scmp.ne.s32.totalorder %s132, %s133
      %p144 = scmp.eq.s32.totalorder %s21, 0
      %p145 = por %p143, %p144
      %p146 = scmp.ne.s32.totalorder %s132, %s133
      %p147 = scmp.eq.s32.totalorder %s22, 1
      %p148 = por %p146, %p147
      %p150 = scmp.ne.s32.totalorder %s133, %s149
      %p151 = scmp.eq.s32.totalorder %s22, 0
      %p152 = por %p150, %p151
      %p153 = scmp.le.s32.totalorder 1, %s16
      %p154 = scmp.lt.s32.totalorder %s16, 3
      %p155 = pnand %p153, %p154
      %p156 = pneg %p155
      // Predicated region
      $region9: #{tpu_custom_call.1} parent=5 // pred_check
        _
      $region10: #{tpu_custom_call.1} parent=5 // pred_check_branch
        %158 = sbr.rel (%p155) target = $region12
      $region11: #{tpu_custom_call.1} parent=5 // pred_region
        %s159 = ssub.s32 %s16, 1
        // Predicated region
        $region13: #{tpu_custom_call.1} parent=11 // pred_check
          %p160 = pneg %p89
        $region14: #{tpu_custom_call.1} parent=11 // pred_check_branch
          %162 = sbr.rel (%p160) target = $region16
        $region15: #{tpu_custom_call.1} parent=11 // pred_region
          %s164 = ssub.s32 4096, 4096
          %165 = vsyncadd [#allocation6], %s164
          %s166 = smul.addr %s26, 128
          %s167 = scalar_lea.hbm %s1, %s166
          %s168 = sshll.u32 [#allocation5], 4
          %s169 = int_to_ptr.vmem [resolvable:$true] %s168
          %174 = dma.hbm_to_vmem [thread:$0]  %s167, 4096, %s169, [#allocation6], 128, 128, 8
        $region16: #{tpu_custom_call.1} parent=11 // pred_fallthru
          _
        // Predicated region
        $region17: #{tpu_custom_call.1} parent=11 // pred_check
          %p175 = pneg %p115
        $region18: #{tpu_custom_call.1} parent=11 // pred_check_branch
          %177 = sbr.rel (%p175) target = $region20
        $region19: #{tpu_custom_call.1} parent=11 // pred_region
          %p178 = scmp.lt.s32.totalorder %s26, 0
          %s179 = scalar_select %p178, %s26, 0
          %s180 = scalar_lea.vmem %s2, %s179
        $region20: #{tpu_custom_call.1} parent=11 // pred_fallthru
          _
      $region12: #{tpu_custom_call.1} parent=5 // pred_fallthru
        _
      %p181 = scmp.lt.s32.totalorder %s16, 2
      // Predicated region
      $region21: #{tpu_custom_call.1} parent=5 // pred_check
        %p182 = pneg %p181
      $region22: #{tpu_custom_call.1} parent=5 // pred_check_branch
        %184 = sbr.rel (%p182) target = $region24
      $region23: #{tpu_custom_call.1} parent=5 // pred_region
        // Predicated region
        $region25: #{tpu_custom_call.1} parent=23 // pred_check
          %p185 = pneg %p57
        $region26: #{tpu_custom_call.1} parent=23 // pred_check_branch
          %187 = sbr.rel (%p185) target = $region28
        $region27: #{tpu_custom_call.1} parent=23 // pred_region
          %s188 = sand.u32 %s47, 1
          %s189 = scalar_lea.sflag [#allocation3], %s188
          %s190 = sand.u32 %s47, 1
          %s191 = smul.addr %s190, 128
          %s192 = scalar_lea.vmem [#allocation2], %s191
          %s193 = smul.u32 8, %s25
          %s195 = ssub.s32 2048, 2048
          %196 = vsyncadd %s189, %s195
          %s197 = smul.addr %s193, 2
          %s198 = smul.addr %s24, 16
          %s199 = sadd.s32 %s197, %s198
          %s200 = smul.addr %s199, 128
          %s201 = scalar_lea.hbm %s0, %s200
          %s202 = sshll.u32 %s192, 4
          %s203 = int_to_ptr.vmem [resolvable:$true] %s202
          %208 = dma.hbm_to_vmem [thread:$0]  %s201, 2048, %s203, %s189, 256, 256, 16
        $region28: #{tpu_custom_call.1} parent=23 // pred_fallthru
          _
      $region24: #{tpu_custom_call.1} parent=5 // pred_fallthru
        _
      %p209 = scmp.le.s32.totalorder 1, %s16
      %p210 = scmp.lt.s32.totalorder %s16, 3
      %p211 = pnand %p209, %p210
      %p212 = pneg %p211
      // Predicated region
      $region29: #{tpu_custom_call.1} parent=5 // pred_check
        _
      $region30: #{tpu_custom_call.1} parent=5 // pred_check_branch
        %214 = sbr.rel (%p211) target = $region32
      $region31: #{tpu_custom_call.1} parent=5 // pred_region
        %s215 = ssub.s32 %s16, 1
        %s216 = sand.u32 %s50, 1
        %s217 = scalar_lea.sflag [#allocation3], %s216
        %s218 = sand.u32 %s50, 1
        %s219 = smul.addr %s218, 128
        %s220 = scalar_lea.vmem [#allocation2], %s219
        // Predicated region
        $region33: #{tpu_custom_call.1} parent=31 // pred_check
          %p221 = pneg %p63
        $region34: #{tpu_custom_call.1} parent=31 // pred_check_branch
          %223 = sbr.rel (%p221) target = $region36
        $region35: #{tpu_custom_call.1} parent=31 // pred_region
          %224 = dma.done %s217, 2048
        $region36: #{tpu_custom_call.1} parent=31 // pred_fallthru
          _
        // Predicated region
        $region37: #{tpu_custom_call.1} parent=31 // pred_check
          %p225 = pneg %p89
        $region38: #{tpu_custom_call.1} parent=31 // pred_check_branch
          %227 = sbr.rel (%p225) target = $region40
        $region39: #{tpu_custom_call.1} parent=31 // pred_region
          %228 = dma.done [#allocation6], 4096
        $region40: #{tpu_custom_call.1} parent=31 // pred_fallthru
          _
        %s229 = sand.u32 %s50, 1
        %s230 = scalar_lea.sflag [#allocation3], %s229
        %s231 = sand.u32 %s50, 1
        %s232 = smul.addr %s231, 128
        %s233 = scalar_lea.vmem [#allocation2], %s232
        %p234 = pneg %p63
        %p235 = pneg %p60
        %p236 = pneg %p89
        %p237 = pneg %p86
        %p238 = scmp.lt.s32.totalorder %s26, 0
        %s239 = scalar_select %p238, %s26, 0
        %s240 = scalar_lea.vmem %s2, %s239
        %p241 = pneg %p115
        %p242 = pneg %p112
        %p243 = pneg %p145
        %p244 = pneg %p142
        %s245 = sand.u32 %s132, 1
        %s246 = scalar_lea.sflag [#allocation4], %s245
        %s247 = sand.u32 %s132, 1
        %s248 = smul.addr %s247, 64
        %s249 = scalar_lea.vmem [#allocation7], %s248
        %s250 = smul.u32 8, %s28
        %p251 = scmp.lt.s32.totalorder %s26, 0
        %s252 = scalar_select %p251, %s26, 0
        %s253 = scalar_lea.vmem %s2, %s252
        %s254 = smul.u32 8, %s28
        %v255 = vld [vmem:[%s220] sm:$0xff]
        %v256 = vld [vmem:[%s220 + $0x8] sm:$0xff]
        %v257 = vld [vmem:[%s220 + $0x10] sm:$0xff]
        %v258 = vld [vmem:[%s220 + $0x18] sm:$0xff]
        %v259 = vld [vmem:[%s220 + $0x20] sm:$0xff]
        %v260 = vld [vmem:[%s220 + $0x28] sm:$0xff]
        %v261 = vld [vmem:[%s220 + $0x30] sm:$0xff]
        %v262 = vld [vmem:[%s220 + $0x38] sm:$0xff]
        %v263 = vld [vmem:[%s220 + $0x40] sm:$0xff]
        %v264 = vld [vmem:[%s220 + $0x48] sm:$0xff]
        %v265 = vld [vmem:[%s220 + $0x50] sm:$0xff]
        %v266 = vld [vmem:[%s220 + $0x58] sm:$0xff]
        %v267 = vld [vmem:[%s220 + $0x60] sm:$0xff]
        %v268 = vld [vmem:[%s220 + $0x68] sm:$0xff]
        %v269 = vld [vmem:[%s220 + $0x70] sm:$0xff]
        %v270 = vld [vmem:[%s220 + $0x78] sm:$0xff]
        %v271 = vld [vmem:[#allocation5] sm:$0xff]
        %v272 = vld [vmem:[#allocation5 + $0x8] sm:$0xff]
        %v273 = vld [vmem:[#allocation5 + $0x10] sm:$0xff]
        %v274 = vld [vmem:[#allocation5 + $0x18] sm:$0xff]
        %v275 = vld [vmem:[#allocation5 + $0x20] sm:$0xff]
        %v276 = vld [vmem:[#allocation5 + $0x28] sm:$0xff]
        %v277 = vld [vmem:[#allocation5 + $0x30] sm:$0xff]
        %v278 = vld [vmem:[#allocation5 + $0x38] sm:$0xff]
        %v279 = vld [vmem:[#allocation5 + $0x40] sm:$0xff]
        %v280 = vld [vmem:[#allocation5 + $0x48] sm:$0xff]
        %v281 = vld [vmem:[#allocation5 + $0x50] sm:$0xff]
        %v282 = vld [vmem:[#allocation5 + $0x58] sm:$0xff]
        %v283 = vld [vmem:[#allocation5 + $0x60] sm:$0xff]
        %v284 = vld [vmem:[#allocation5 + $0x68] sm:$0xff]
        %v285 = vld [vmem:[#allocation5 + $0x70] sm:$0xff]
        %v286 = vld [vmem:[#allocation5 + $0x78] sm:$0xff]
        %v287 = vld [vmem:[#allocation5 + $0x80] sm:$0xff]
        %v288 = vld [vmem:[#allocation5 + $0x88] sm:$0xff]
        %v289 = vld [vmem:[#allocation5 + $0x90] sm:$0xff]
        %v290 = vld [vmem:[#allocation5 + $0x98] sm:$0xff]
        %v291 = vld [vmem:[#allocation5 + $0xa0] sm:$0xff]
        %v292 = vld [vmem:[#allocation5 + $0xa8] sm:$0xff]
        %v293 = vld [vmem:[#allocation5 + $0xb0] sm:$0xff]
        %v294 = vld [vmem:[#allocation5 + $0xb8] sm:$0xff]
        %v295 = vld [vmem:[#allocation5 + $0xc0] sm:$0xff]
        %v296 = vld [vmem:[#allocation5 + $0xc8] sm:$0xff]
        %v297 = vld [vmem:[#allocation5 + $0xd0] sm:$0xff]
        %v298 = vld [vmem:[#allocation5 + $0xd8] sm:$0xff]
        %v299 = vld [vmem:[#allocation5 + $0xe0] sm:$0xff]
        %v300 = vld [vmem:[#allocation5 + $0xe8] sm:$0xff]
        %v301 = vld [vmem:[#allocation5 + $0xf0] sm:$0xff]
        %v302 = vld [vmem:[#allocation5 + $0xf8] sm:$0xff]
        %v303 = vld [vmem:[%s253] sm:$0x1]
        %v305 = vlaneseq
        %v306 = vshrl.u32 %v305, 7
        %v307 = vsub.s32 0, %v306
        %v308 = vrot.slane %v303, %v307
        %310 = vmatprep.subr.mxu0 0.0
        %311 = vmatpush1.msra.mxu0 %v271
        %312 = vmatprep.subr.mxu0 0.0
        %313 = vmatpush1.msra.mxu0 %v272
        %314 = vmatprep.subr.mxu0 0.0
        %315 = vmatpush1.msra.mxu0 %v273
        %316 = vmatprep.subr.mxu0 0.0
        %317 = vmatpush1.msra.mxu0 %v274
        %318 = vmatprep.subr.mxu0 0.0
        %319 = vmatpush1.msra.mxu0 %v275
        %320 = vmatprep.subr.mxu0 0.0
        %321 = vmatpush1.msra.mxu0 %v276
        %322 = vmatprep.subr.mxu0 0.0
        %323 = vmatpush1.msra.mxu0 %v277
        %324 = vmatprep.subr.mxu0 0.0
        %325 = vmatpush1.msra.mxu0 %v278
        %326 = vmatprep.subr.mxu0 0.0
        %327 = vmatpush1.msra.mxu0 %v279
        %328 = vmatprep.subr.mxu0 0.0
        %329 = vmatpush1.msra.mxu0 %v280
        %330 = vmatprep.subr.mxu0 0.0
        %331 = vmatpush1.msra.mxu0 %v281
        %332 = vmatprep.subr.mxu0 0.0
        %333 = vmatpush1.msra.mxu0 %v282
        %334 = vmatprep.subr.mxu0 0.0
        %335 = vmatpush1.msra.mxu0 %v283
        %336 = vmatprep.subr.mxu0 0.0
        %337 = vmatpush1.msra.mxu0 %v284
        %338 = vmatprep.subr.mxu0 0.0
        %339 = vmatpush1.msra.mxu0 %v285
        %340 = vmatprep.subr.mxu0 0.0
        %341 = vmatpush1.msra.mxu0 %v286
        %342 = vmatprep.subr.mxu0 0.0
        %343 = vmatpush1.msra.mxu0 %v287
        %344 = vmatprep.subr.mxu0 0.0
        %345 = vmatpush1.msra.mxu0 %v288
        %346 = vmatprep.subr.mxu0 0.0
        %347 = vmatpush1.msra.mxu0 %v289
        %348 = vmatprep.subr.mxu0 0.0
        %349 = vmatpush1.msra.mxu0 %v290
        %350 = vmatprep.subr.mxu0 0.0
        %351 = vmatpush1.msra.mxu0 %v291
        %352 = vmatprep.subr.mxu0 0.0
        %353 = vmatpush1.msra.mxu0 %v292
        %354 = vmatprep.subr.mxu0 0.0
        %355 = vmatpush1.msra.mxu0 %v293
        %356 = vmatprep.subr.mxu0 0.0
        %357 = vmatpush1.msra.mxu0 %v294
        %358 = vmatprep.subr.mxu0 0.0
        %359 = vmatpush1.msra.mxu0 %v295
        %360 = vmatprep.subr.mxu0 0.0
        %361 = vmatpush1.msra.mxu0 %v296
        %362 = vmatprep.subr.mxu0 0.0
        %363 = vmatpush1.msra.mxu0 %v297
        %364 = vmatprep.subr.mxu0 0.0
        %365 = vmatpush1.msra.mxu0 %v298
        %366 = vmatprep.subr.mxu0 0.0
        %367 = vmatpush1.msra.mxu0 %v299
        %368 = vmatprep.subr.mxu0 0.0
        %369 = vmatpush1.msra.mxu0 %v300
        %370 = vmatprep.subr.mxu0 0.0
        %371 = vmatpush1.msra.mxu0 %v301
        %372 = vmatprep.subr.mxu0 0.0
        %373 = vmatpush1.msra.mxu0 %v302
        %374 = vmatprep.mubr.f32.mxu0 %v256
        %375 = vmatmul.mubr.f32.gmra.mrb[0].mxu0 %v255
        %v376 = vpop.f32.mrb[0].mxu0
        %v377 = vadd.f32 %v308, %v376
        %v378 = vpop.f32.mrb[0].mxu0
        %379 = vmatprep.mubr.f32.mxu0 %v258
        %380 = vmatmul.mubr.f32.gmra.mrb[0].mxu0 %v257
        %v381 = vpop.f32.mrb[0].mxu0
        %v382 = vadd.f32 %v308, %v381
        %v383 = vpop.f32.mrb[0].mxu0
        %384 = vmatprep.mubr.f32.mxu0 %v260
        %385 = vmatmul.mubr.f32.gmra.mrb[0].mxu0 %v259
        %v386 = vpop.f32.mrb[0].mxu0
        %v387 = vadd.f32 %v308, %v386
        %v388 = vpop.f32.mrb[0].mxu0
        %389 = vmatprep.mubr.f32.mxu0 %v262
        %390 = vmatmul.mubr.f32.gmra.mrb[0].mxu0 %v261
        %v391 = vpop.f32.mrb[0].mxu0
        %v392 = vadd.f32 %v308, %v391
        %v393 = vpop.f32.mrb[0].mxu0
        %394 = vmatprep.mubr.f32.mxu0 %v264
        %395 = vmatmul.mubr.f32.gmra.mrb[0].mxu0 %v263
        %v396 = vpop.f32.mrb[0].mxu0
        %v397 = vadd.f32 %v308, %v396
        %v398 = vpop.f32.mrb[0].mxu0
        %399 = vmatprep.mubr.f32.mxu0 %v266
        %400 = vmatmul.mubr.f32.gmra.mrb[0].mxu0 %v265
        %v401 = vpop.f32.mrb[0].mxu0
        %v402 = vadd.f32 %v308, %v401
        %v403 = vpop.f32.mrb[0].mxu0
        %404 = vmatprep.mubr.f32.mxu0 %v268
        %405 = vmatmul.mubr.f32.gmra.mrb[0].mxu0 %v267
        %v406 = vpop.f32.mrb[0].mxu0
        %v407 = vadd.f32 %v308, %v406
        %v408 = vpop.f32.mrb[0].mxu0
        %409 = vmatprep.mubr.f32.mxu0 %v270
        %410 = vmatmul.mubr.f32.gmra.mrb[0].mxu0 %v269
        %v411 = vpop.f32.mrb[0].mxu0
        %v412 = vadd.f32 %v308, %v411
        %v413 = vpop.f32.mrb[0].mxu0
        %414 = vdwg.mxu0
        %v415 = vmax.f32 %v377, 0.0
        %v416 = vmax.f32 %v382, 0.0
        %v417 = vmax.f32 %v387, 0.0
        %v418 = vmax.f32 %v392, 0.0
        %v419 = vmax.f32 %v397, 0.0
        %v420 = vmax.f32 %v402, 0.0
        %v421 = vmax.f32 %v407, 0.0
        %v422 = vmax.f32 %v412, 0.0
        %423 = vst [vmem:[%s249] sm:$0xff] %v415
        %424 = vst [vmem:[%s249 + $0x8] sm:$0xff] %v416
        %425 = vst [vmem:[%s249 + $0x10] sm:$0xff] %v417
        %426 = vst [vmem:[%s249 + $0x18] sm:$0xff] %v418
        %427 = vst [vmem:[%s249 + $0x20] sm:$0xff] %v419
        %428 = vst [vmem:[%s249 + $0x28] sm:$0xff] %v420
        %429 = vst [vmem:[%s249 + $0x30] sm:$0xff] %v421
        %430 = vst [vmem:[%s249 + $0x38] sm:$0xff] %v422
        %s431 = sand.u32 %s132, 1
        %s432 = scalar_lea.sflag [#allocation4], %s431
        %s433 = sand.u32 %s132, 1
        %s434 = smul.addr %s433, 64
        %s435 = scalar_lea.vmem [#allocation7], %s434
        // Predicated region
        $region41: #{tpu_custom_call.1} parent=31 // pred_check
          %p436 = pneg %p142
        $region42: #{tpu_custom_call.1} parent=31 // pred_check_branch
          %438 = sbr.rel (%p436) target = $region44
        $region43: #{tpu_custom_call.1} parent=31 // pred_region
          %s439 = smul.u32 8, %s28
          %s441 = ssub.s32 1024, 1024
          %442 = vsyncadd %s432, %s441
          %s443 = sadd.s32 %s26, %s439
          %s444 = smul.addr %s27, 8
          %s445 = sadd.s32 %s443, %s444
          %s446 = smul.addr %s445, 128
          %s447 = scalar_lea.hbm %s3, %s446
          %s448 = sshll.u32 %s435, 4
          %s449 = int_to_ptr.vmem [resolvable:$true] %s448
          %454 = dma.vmem_to_hbm [thread:$0]  %s449, 1024, %s447, %s432, 128, 128, 8
        $region44: #{tpu_custom_call.1} parent=31 // pred_fallthru
          _
      $region32: #{tpu_custom_call.1} parent=5 // pred_fallthru
        _
      %p455 = scmp.le.s32.totalorder 2, %s16
      // Predicated region
      $region45: #{tpu_custom_call.1} parent=5 // pred_check
        %p456 = pneg %p455
      $region46: #{tpu_custom_call.1} parent=5 // pred_check_branch
        %458 = sbr.rel (%p456) target = $region48
      $region47: #{tpu_custom_call.1} parent=5 // pred_region
        %s459 = ssub.s32 %s16, 2
        // Predicated region
        $region49: #{tpu_custom_call.1} parent=47 // pred_check
          %p460 = pneg %p148
        $region50: #{tpu_custom_call.1} parent=47 // pred_check_branch
          %462 = sbr.rel (%p460) target = $region52
        $region51: #{tpu_custom_call.1} parent=47 // pred_region
          %s463 = sand.u32 %s133, 1
          %s464 = scalar_lea.sflag [#allocation4], %s463
          %s465 = sand.u32 %s133, 1
          %s466 = smul.addr %s465, 64
          %s467 = scalar_lea.vmem [#allocation7], %s466
          %468 = dma.done %s464, 1024
        $region52: #{tpu_custom_call.1} parent=47 // pred_fallthru
          _
      $region48: #{tpu_custom_call.1} parent=5 // pred_fallthru
        _
    $region6: #{tpu_custom_call.1} parent=1 // loop_footer
      %s20 = sadd.s32 1, %s16
    $region7: #{tpu_custom_call.1} parent=1 // loop_footer_branch
      %15 = sbr.rel target = $region3
    $region8: #{tpu_custom_call.1} parent=1 // loop_exit
      _
    %469 = vsyncpa [#allocation3], 1
    %s470 = scalar_lea.sflag [#allocation3], 1
    %471 = vsyncpa %s470, 1
    %472 = vsyncpa [#allocation6], 1
    %473 = vsyncpa [#allocation4], 1
    %s474 = scalar_lea.sflag [#allocation4], 1
    %475 = vsyncpa %s474, 1

</llo_original>
